<compile_context>
chip_gen: v7x
topology: tpu7x:2x2x1
jax: 0.10.0
libtpu: 0.0.40
codegen_flags: <defaults>
</compile_context>

<pallas_src>
import jax
import jax.numpy as jnp
from jax.experimental import pallas as pl
from jax.experimental.pallas import tpu as pltpu


def _round_up(x: int, m: int) -> int:
    return (x + m - 1) // m * m


# --------------------------------------------------------------------------- kernel
def _make_gating_kernel(in_features: int, h_pad: int, o_pad: int, n_hidden: int):
    def gating_kernel(scale_ref, x_ref, wh_ref, wo_ref, b_ref, out_ref):
        wdt = wh_ref.dtype                       # f32 (or bf16 if weight_dtype=bf16)
        h = x_ref[...]                           # [TM, in_features], f32
        k = in_features
        for i in range(n_hidden):                # statically unrolled
            w = wh_ref[i * h_pad:i * h_pad + k, :]      # [k, h_pad] (static slice)
            b = b_ref[i:i + 1, :h_pad]                  # [1, h_pad] f32
            h = jnp.dot(h.astype(wdt), w, preferred_element_type=jnp.float32) + b
            h = jnp.maximum(h, 0.0)              # ReLU on hidden layers only
            k = h_pad                            # padded activation width from now on

        # Output layer: 1/temperature already folded into wo / output bias row.
        logits = jnp.dot(h.astype(wo_ref.dtype), wo_ref[...],
                         preferred_element_type=jnp.float32)
        logits = logits + b_ref[n_hidden:n_hidden + 1, :o_pad]

        # Padded logit lanes carry -1e30 (folded into the f32 bias row) so they vanish
        # in the softmax and the padded output lanes are exact zeros.
        # NOTE: keep this mask (and the bias slab) in f32 — stored in bf16 it could be
        # treated as -inf and a refactor letting padded lanes into the row max would
        # then produce inf - inf = NaN.
        m = jnp.max(logits, axis=-1, keepdims=True)
        e = jnp.exp(logits - m)
        inv = pl.reciprocal(jnp.sum(e, axis=-1, keepdims=True), approx=True)  # EUP vrcp
        out_ref[...] = (e * (inv * scale_ref[0])).astype(out_ref.dtype)

    return gating_kernel


# ------------------------------------------------------------------ parameter packing
def pack_params(raw, *, in_features, hidden_dim, out_features, n_hidden,
                temperature, weight_dtype=jnp.float32):
    """One-time parameter transform into VMEM slabs.

    wh    : [n_hidden*h_pad, h_pad]  hidden-layer weights, layer i at rows [i*h_pad, ...)
    wo    : [h_pad, o_pad]           output-layer weight (already divided by temperature)
    bslab : [8k, max(h_pad,o_pad)]   f32 biases; row n_hidden = output bias/T with -1e30
                                     on padded logit lanes (softmax mask)
    """
    assert n_hidden >= 1  # TODO(synk): n_hidden == 0 would need a single-layer pack.
    h_pad = _round_up(hidden_dim, 128)
    o_pad = _round_up(out_features, 128)
    b_pad = max(h_pad, o_pad)
    b_rows = _round_up(n_hidden + 1, 8)

    wh = jnp.zeros((n_hidden * h_pad, h_pad), jnp.float32)
    for i in range(n_hidden):
        w = raw[f"w{i}"].astype(jnp.float32)                    # [fan_in, hidden_dim]
        wh = wh.at[i * h_pad:i * h_pad + w.shape[0], :w.shape[1]].set(w)

    wo = jnp.zeros((h_pad, o_pad), jnp.float32)
    w_last = raw[f"w{n_hidden}"].astype(jnp.float32) / temperature
    wo = wo.at[:w_last.shape[0], :w_last.shape[1]].set(w_last)

    bslab = jnp.zeros((b_rows, b_pad), jnp.float32)
    for i in range(n_hidden):
        b = raw[f"b{i}"].astype(jnp.float32).reshape(-1)
        bslab = bslab.at[i, :b.shape[0]].set(b)
    b_last = raw[f"b{n_hidden}"].astype(jnp.float32).reshape(-1) / temperature
    bslab = bslab.at[n_hidden, :o_pad].set(-1e30)       # mask padded logit lanes (f32!)
    bslab = bslab.at[n_hidden, :b_last.shape[0]].set(b_last)

    return {
        "wh": wh.astype(weight_dtype),     # bf16 on v6e/v7x halves weight DMA + VMEM
        "wo": wo.astype(weight_dtype),
        "bslab": bslab,                    # biases / mask stay f32
        "logit_scale": raw["logit_scale"].astype(jnp.float32).reshape(1),
        "in_features": in_features,
        "hidden_dim": hidden_dim,
        "out_features": out_features,
        "n_hidden": n_hidden,
        "h_pad": h_pad,
        "o_pad": o_pad,
    }


# ------------------------------------------------------------------------- forward
def gating_network_forward(x, packed, *, block_rows: int = 8192,
                           return_padded: bool = False):
    """x: [B, in_features] f32 -> softmax(logits/T, dim=1) * logit_scale.

    Returns [B, out_features] (module interface) or, with return_padded=True, the
    lane-dense [B, o_pad] kernel output (padded lanes are exact zeros) so consumers
    can skip the extra HBM pass of the narrowing slice.
    """
    B, in_features = x.shape
    assert in_features == packed["in_features"]
    h_pad, o_pad = packed["h_pad"], packed["o_pad"]
    n_hidden = packed["n_hidden"]
    out_features = packed["out_features"]
    wh, wo, bslab, scale = packed["wh"], packed["wo"], packed["bslab"], packed["logit_scale"]

    # --- row tile: big tiles amortize per-step overhead; >= 2 grid steps when possible
    # so the "parallel" batch axis can split across both TensorCores on v7x.
    block_rows = max(8, _round_up(block_rows, 8))
    if B <= 8:
        tm = B
    elif B <= 2 * block_rows:
        tm = min(_round_up(pl.cdiv(B, 2), 8), B)
    else:
        tm = block_rows

    # --- VMEM budget: parameter slabs single-buffered, x/out double-buffered.
    def needed(tm_):
        return (wh.size * wh.dtype.itemsize
                + wo.size * wo.dtype.itemsize
                + bslab.size * 4
                + 2 * tm_ * in_features * 4          # double-buffered input tile
                + 2 * tm_ * o_pad * 4                # double-buffered output tile
                + 2 * tm_ * max(h_pad, o_pad) * 4    # live activations / temporaries
                + (4 << 20))                         # headroom for compiler scratch

    try:
        cap = int(pltpu.get_tpu_info().vmem_capacity_bytes)
    except Exception:
        cap = 64 << 20                               # conservative default (v7x-sized)
    budget = (cap * 3) // 4                          # ~48 MiB v7x, ~96 MiB v5e/v6e
    while needed(tm) > budget and tm > 256:          # shrink tile if it would not fit
        tm = max(256, _round_up(tm // 2, 8))
    vmem_limit = int(min(max(needed(tm), 16 << 20), budget))

    grid = (pl.cdiv(B, tm),)
    kernel = _make_gating_kernel(in_features, h_pad, o_pad, n_hidden)

    # Grid-invariant slabs: constant index_map + single buffer (no 2x VMEM residency).
    resident = dict(pipeline_mode=pl.Buffered(1))

    out_padded = pl.pallas_call(
        kernel,
        grid=grid,
        in_specs=[
            pl.BlockSpec(memory_space=pltpu.MemorySpace.SMEM),        # logit_scale scalar
            pl.BlockSpec((tm, in_features), lambda i: (i, 0)),        # x rows (pipelined)
            pl.BlockSpec(wh.shape, lambda i: (0, 0), **resident),     # hidden weights
            pl.BlockSpec(wo.shape, lambda i: (0, 0), **resident),     # output weights
            pl.BlockSpec(bslab.shape, lambda i: (0, 0), **resident),  # biases + pad mask
        ],
        out_specs=pl.BlockSpec((tm, o_pad), lambda i: (i, 0)),        # lane-dense store
        out_shape=jax.ShapeDtypeStruct((B, o_pad), jnp.float32),
        compiler_params=pltpu.CompilerParams(
            dimension_semantics=("parallel",),       # batch axis -> both TCs on v7x
            vmem_limit_bytes=vmem_limit,
        ),
    )(scale, x, wh, wo, bslab)

    if return_padded:
        return out_padded                 # padded lanes are exact zeros
    return out_padded[:, :out_features]   # module interface (extra XLA copy; see flag)


# ------------------------------------------------------------------------ reference
def init_raw_params(key, in_features, hidden_dim, out_features, n_hidden,
                    logit_scale=1.0):
    """Deterministic synthetic init (uniform ~ PyTorch Linear default range)."""
    raw = {}
    dims = [in_features] + [hidden_dim] * n_hidden + [out_features]
    for i in range(n_hidden + 1):
        fan_in, fan_out = dims[i], dims[i + 1]
        key, kw, kb = jax.random.split(key, 3)
        bound = 1.0 / (fan_in ** 0.5)
        raw[f"w{i}"] = jax.random.uniform(kw, (fan_in, fan_out), jnp.float32,
                                          -bound, bound)
        raw[f"b{i}"] = jax.random.uniform(kb, (fan_out,), jnp.float32, -bound, bound)
    raw["logit_scale"] = jnp.full((1,), logit_scale, jnp.float32)
    return raw


def reference_forward(x, raw, *, n_hidden, temperature):
    """Pure-JAX reference matching the PyTorch module (eval mode, dropout=0)."""
    h = x
    for i in range(n_hidden):
        h = jnp.maximum(h @ raw[f"w{i}"] + raw[f"b{i}"], 0.0)
    logits = h @ raw[f"w{n_hidden}"] + raw[f"b{n_hidden}"]
    p = jax.nn.softmax(logits / temperature, axis=1)
    return p * raw["logit_scale"][0]


# ------------------------------------------------------------------------------ main
if __name__ == "__main__":
    batch, in_features, hidden_dim, out_features = 64, 32, 32, 8
    n_hidden, temperature, logit_scale = 3, 10.0, 1.0

    key = jax.random.PRNGKey(0)
    key, kx = jax.random.split(key)
    x = jax.random.normal(kx, (batch, in_features), jnp.float32)

    raw = init_raw_params(key, in_features, hidden_dim, out_features, n_hidden,
                          logit_scale)
    packed = pack_params(raw, in_features=in_features, hidden_dim=hidden_dim,
                         out_features=out_features, n_hidden=n_hidden,
                         temperature=temperature)
    # NOTE: pass weight_dtype=jnp.bfloat16 above on v6e/v7x in production (the kernel
    # keeps f32 accumulation + f32 biases); f32 is used here for a tight ref check.

    ref = reference_forward(x, raw, n_hidden=n_hidden, temperature=temperature)

    # Default path (grid=(2,) -> both TCs on v7x), small-tile pipelined path (grid=(4,)),
    # and the padded-output path that skips the wrapper-side slice.
    out = jax.block_until_ready(gating_network_forward(x, packed))
    out_tiled = jax.block_until_ready(gating_network_forward(x, packed, block_rows=16))
    out_pad = jax.block_until_ready(gating_network_forward(x, packed, return_padded=True))

    assert out.shape == (batch, out_features)
    assert out_pad.shape == (batch, packed["o_pad"])
    # Tolerances relaxed because of the approx (EUP) reciprocal in the softmax denom.
    assert jnp.allclose(out, ref, atol=2e-3, rtol=2e-3), "mismatch vs reference"
    assert jnp.allclose(out_tiled, ref, atol=2e-3, rtol=2e-3), "mismatch (tiled path)"
    assert jnp.allclose(out_pad[:, :out_features], ref, atol=2e-3, rtol=2e-3), \
        "mismatch (padded path)"
    assert jnp.allclose(out_pad[:, out_features:], 0.0), "padded lanes must be zero"
    assert jnp.allclose(jnp.sum(out, axis=1), logit_scale, atol=5e-3)

    print("KERNEL_OK")
</pallas_src>

<mosaic_0001>
module attributes {stable_mosaic.version = 11 : i64} {
  func.func @gating_kernel(%arg0: i32, %arg1: memref<1xf32, #tpu.memory_space<smem>>, %arg2: memref<32x32xf32, #tpu.memory_space<vmem>>, %arg3: memref<384x128xf32, #tpu.memory_space<vmem>>, %arg4: memref<128x128xf32, #tpu.memory_space<vmem>>, %arg5: memref<8x128xf32, #tpu.memory_space<vmem>>, %arg6: memref<32x128xf32, #tpu.memory_space<vmem>>) attributes {dimension_semantics = [#tpu.dimension_semantics<parallel>], iteration_bounds = array<i64: 2>, scalar_prefetch = 0 : i64, scratch_operands = 0 : i64, tpu.core_type = #tpu.core_type<tc>, window_params = [{transform_indices = @transform_0, window_bounds = array<i64: 1>}, {transform_indices = @transform_1, window_bounds = array<i64: 32, 32>}, {pipeline_mode = #tpu.pipeline_mode<synchronous>, transform_indices = @transform_2, window_bounds = array<i64: 384, 128>}, {pipeline_mode = #tpu.pipeline_mode<synchronous>, transform_indices = @transform_3, window_bounds = array<i64: 128, 128>}, {pipeline_mode = #tpu.pipeline_mode<synchronous>, transform_indices = @transform_4, window_bounds = array<i64: 8, 128>}, {transform_indices = @transform_5, window_bounds = array<i64: 32, 128>}]} {
    %c0 = arith.constant 0 : index
    %c0_0 = arith.constant 0 : index
    %0 = vector.load %arg2[%c0, %c0_0] : memref<32x32xf32, #tpu.memory_space<vmem>>, vector<32x32xf32>
    %c0_1 = arith.constant 0 : index
    %c0_2 = arith.constant 0 : index
    %1 = vector.load %arg3[%c0_1, %c0_2] : memref<384x128xf32, #tpu.memory_space<vmem>>, vector<32x128xf32>
    %c0_3 = arith.constant 0 : index
    %c0_4 = arith.constant 0 : index
    %2 = vector.load %arg5[%c0_3, %c0_4] : memref<8x128xf32, #tpu.memory_space<vmem>>, vector<1x128xf32>
    %cst = arith.constant dense<0.000000e+00> : vector<32x128xf32>
    %3 = tpu.matmul %0, %1, %cst {dimension_numbers = #tpu.dot_dimension_numbers<[1], [0], [0], [1], [0, 0, 1, 1], [], []>} : vector<32x32xf32>, vector<32x128xf32>, vector<32x128xf32> -> vector<32x128xf32>
    %4 = vector.broadcast %2 : vector<1x128xf32> to vector<32x128xf32>
    %5 = arith.addf %3, %4 : vector<32x128xf32>
    %cst_5 = arith.constant 0.000000e+00 : f32
    %6 = vector.broadcast %cst_5 : f32 to vector<32x128xf32>
    %7 = arith.maximumf %5, %6 : vector<32x128xf32>
    %c128 = arith.constant 128 : index
    %c0_6 = arith.constant 0 : index
    %8 = vector.load %arg3[%c128, %c0_6] : memref<384x128xf32, #tpu.memory_space<vmem>>, vector<128x128xf32>
    %c1 = arith.constant 1 : index
    %c0_7 = arith.constant 0 : index
    %9 = vector.load %arg5[%c1, %c0_7] : memref<8x128xf32, #tpu.memory_space<vmem>>, vector<1x128xf32>
    %cst_8 = arith.constant dense<0.000000e+00> : vector<32x128xf32>
    %10 = tpu.matmul %7, %8, %cst_8 {dimension_numbers = #tpu.dot_dimension_numbers<[1], [0], [0], [1], [0, 0, 1, 1], [], []>} : vector<32x128xf32>, vector<128x128xf32>, vector<32x128xf32> -> vector<32x128xf32>
    %11 = vector.broadcast %9 : vector<1x128xf32> to vector<32x128xf32>
    %12 = arith.addf %10, %11 : vector<32x128xf32>
    %cst_9 = arith.constant 0.000000e+00 : f32
    %13 = vector.broadcast %cst_9 : f32 to vector<32x128xf32>
    %14 = arith.maximumf %12, %13 : vector<32x128xf32>
    %c256 = arith.constant 256 : index
    %c0_10 = arith.constant 0 : index
    %15 = vector.load %arg3[%c256, %c0_10] : memref<384x128xf32, #tpu.memory_space<vmem>>, vector<128x128xf32>
    %c2 = arith.constant 2 : index
    %c0_11 = arith.constant 0 : index
    %16 = vector.load %arg5[%c2, %c0_11] : memref<8x128xf32, #tpu.memory_space<vmem>>, vector<1x128xf32>
    %cst_12 = arith.constant dense<0.000000e+00> : vector<32x128xf32>
    %17 = tpu.matmul %14, %15, %cst_12 {dimension_numbers = #tpu.dot_dimension_numbers<[1], [0], [0], [1], [0, 0, 1, 1], [], []>} : vector<32x128xf32>, vector<128x128xf32>, vector<32x128xf32> -> vector<32x128xf32>
    %18 = vector.broadcast %16 : vector<1x128xf32> to vector<32x128xf32>
    %19 = arith.addf %17, %18 : vector<32x128xf32>
    %cst_13 = arith.constant 0.000000e+00 : f32
    %20 = vector.broadcast %cst_13 : f32 to vector<32x128xf32>
    %21 = arith.maximumf %19, %20 : vector<32x128xf32>
    %c0_14 = arith.constant 0 : index
    %c0_15 = arith.constant 0 : index
    %22 = vector.load %arg4[%c0_14, %c0_15] : memref<128x128xf32, #tpu.memory_space<vmem>>, vector<128x128xf32>
    %cst_16 = arith.constant dense<0.000000e+00> : vector<32x128xf32>
    %23 = tpu.matmul %21, %22, %cst_16 {dimension_numbers = #tpu.dot_dimension_numbers<[1], [0], [0], [1], [0, 0, 1, 1], [], []>} : vector<32x128xf32>, vector<128x128xf32>, vector<32x128xf32> -> vector<32x128xf32>
    %c3 = arith.constant 3 : index
    %c0_17 = arith.constant 0 : index
    %24 = vector.load %arg5[%c3, %c0_17] : memref<8x128xf32, #tpu.memory_space<vmem>>, vector<1x128xf32>
    %25 = vector.broadcast %24 : vector<1x128xf32> to vector<32x128xf32>
    %26 = arith.addf %23, %25 : vector<32x128xf32>
    %cst_18 = arith.constant dense<0xFF800000> : vector<32xf32>
    %27 = vector.multi_reduction <maximumf>, %26, %cst_18 [1] : vector<32x128xf32> to vector<32xf32>
    %28 = vector.shape_cast %27 : vector<32xf32> to vector<32x1xf32>
    %29 = vector.broadcast %28 : vector<32x1xf32> to vector<32x128xf32>
    %30 = arith.subf %26, %29 : vector<32x128xf32>
    %31 = math.exp %30 : vector<32x128xf32>
    %cst_19 = arith.constant dense<0.000000e+00> : vector<32xf32>
    %32 = vector.multi_reduction <add>, %31, %cst_19 [1] : vector<32x128xf32> to vector<32xf32>
    %33 = vector.shape_cast %32 : vector<32xf32> to vector<32x1xf32>
    %34 = tpu.reciprocal %33 {approx = true} : vector<32x1xf32> -> vector<32x1xf32>
    %c0_20 = arith.constant 0 : index
    %35 = memref.load %arg1[%c0_20] : memref<1xf32, #tpu.memory_space<smem>>
    %36 = vector.broadcast %35 : f32 to vector<32x1xf32>
    %37 = arith.mulf %34, %36 : vector<32x1xf32>
    %38 = vector.broadcast %37 : vector<32x1xf32> to vector<32x128xf32>
    %39 = arith.mulf %31, %38 : vector<32x128xf32>
    %c0_21 = arith.constant 0 : index
    %c0_22 = arith.constant 0 : index
    %40 = vector.load %arg6[%c0_21, %c0_22] : memref<32x128xf32, #tpu.memory_space<vmem>>, vector<32x128xf32>
    tpu.vector_store %arg6[%c0_21, %c0_22], %39 {strides = array<i32>} : memref<32x128xf32, #tpu.memory_space<vmem>>, vector<32x128xf32>,
    return
  }
  func.func @transform_0(%arg0: i32) -> i32 {
    %c0_i32 = arith.constant 0 : i32
    %c0_i32_0 = arith.constant 0 : i32
    return %c0_i32 : i32
  }
  func.func @transform_1(%arg0: i32) -> (i32, i32) {
    %c0_i32 = arith.constant 0 : i32
    %c0_i32_0 = arith.constant 0 : i32
    return %arg0, %c0_i32 : i32, i32
  }
  func.func @transform_2(%arg0: i32) -> (i32, i32) {
    %c0_i32 = arith.constant 0 : i32
    %c0_i32_0 = arith.constant 0 : i32
    %c0_i32_1 = arith.constant 0 : i32
    return %c0_i32, %c0_i32_0 : i32, i32
  }
  func.func @transform_3(%arg0: i32) -> (i32, i32) {
    %c0_i32 = arith.constant 0 : i32
    %c0_i32_0 = arith.constant 0 : i32
    %c0_i32_1 = arith.constant 0 : i32
    return %c0_i32, %c0_i32_0 : i32, i32
  }
  func.func @transform_4(%arg0: i32) -> (i32, i32) {
    %c0_i32 = arith.constant 0 : i32
    %c0_i32_0 = arith.constant 0 : i32
    %c0_i32_1 = arith.constant 0 : i32
    return %c0_i32, %c0_i32_0 : i32, i32
  }
  func.func @transform_5(%arg0: i32) -> (i32, i32) {
    %c0_i32 = arith.constant 0 : i32
    %c0_i32_0 = arith.constant 0 : i32
    return %arg0, %c0_i32 : i32, i32
  }
}

</mosaic_0001>

<llo_original>
// kernel: tpu_custom_call.1
$region0: #{tpu_custom_call.1}
  #allocation0 [shape = 'u32[]', space=smem, size = 0x4, offset = 0x4, fixed_abs, tag = 'smem constant byte address 0x4 - core index']
  #allocation1 [shape = 'u32[144,128]{1,0:T(1,128)}', space=vmem, size = 0x12000, scoped, tag = 'internal scratch']
  #allocation2 [shape = 'f32[1]{0:T(128)S(6)}', space=smem, size = 0x200, scoped, tag = 'scoped memory for tpu_custom_call.1']
  %s0 = inlined_call_operand.<no memory space> [shape: f32[1], index: 0, kind: input, shape index: {}]
  %s1 = inlined_call_operand.vmem [shape: f32[64,32], index: 1, kind: input, shape index: {}]
  %s2 = inlined_call_operand.hbm [shape: f32[384,128], index: 2, kind: input, shape index: {}]
  %s3 = inlined_call_operand.hbm [shape: f32[128,128], index: 3, kind: input, shape index: {}]
  %s4 = inlined_call_operand.vmem [shape: f32[8,128], index: 4, kind: input, shape index: {}]
  %s5 = inlined_call_operand.hbm [shape: f32[64,128], index: 5, kind: output, shape index: {}]
  %s6 = sld [smem:[#allocation0]]
  $region61: #{tpu_custom_call.1} parent=0
    _
  %s8 = ssub.s32 1, %s6
  %s9 = scalar_select 0, %s8, %s6
  %10 = sst [smem:[#allocation2]] %s0
  $region1: #{tpu_custom_call.1} parent=0
    #allocation3 [shape = 'u8[196608]{0}', space=vmem, size = 0x30000, scoped, tag = 'input window, operand 2, single buffered']
    #allocation4 [shape = 's32[2]{0}', space=sflag, size = 0x8, scoped, tag = 'scoped memory for tpu_custom_call.1']
    #allocation5 [shape = 's32[2]{0}', space=sflag, size = 0x8, scoped, tag = 'scoped memory for tpu_custom_call.1']
    #allocation6 [shape = 'u8[65536]{0}', space=vmem, size = 0x10000, scoped, tag = 'input window, operand 3, single buffered']
    #allocation7 [shape = 's32[1]{0}', space=sflag, size = 0x4, scoped, tag = 'scoped memory for tpu_custom_call.1']
    #allocation8 [shape = 'u8[32768]{0}', space=vmem, size = 0x8000, scoped, tag = 'output window, operand 0']
    %11 = vsyncpa [#allocation4], 0
    %12 = vsyncpa [#allocation7], 0
    %13 = vsyncpa [#allocation5], 0
    %s14 = scalar_lea.sflag [#allocation5], 1
    %15 = vsyncpa %s14, 0
    loop: start=0, step=1, limit=4
    $region2: #{tpu_custom_call.1} parent=1 // loop_pre_header
      _
    $region3: #{tpu_custom_call.1} parent=1 // loop_header
      %s17 = sphi 0, %s21
      %p18 = scmp.ge.s32.totalorder %s17, 4
      %s25 = sphi 0, %s25
      %s27 = sphi 0, %s25
      %s28 = sphi 0, %s27
      %s42 = sphi 0, %s28
      %s48 = sphi 0, %s50
      %s51 = sphi 0, %s48
      %s52 = sphi 0, %s51
      %s68 = sphi 0, %s52
      %s72 = sphi 0, %s72
      %s74 = sphi 0, %s72
      %s75 = sphi 0, %s74
      %s89 = sphi 0, %s75
      %s93 = sphi 0, %s93
      %s95 = sphi 0, %s93
      %s96 = sphi 0, %s95
      %s110 = sphi 0, %s96
      %s114 = sphi 0, %s114
      %s116 = sphi 0, %s114
      %s117 = sphi 0, %s116
      %s131 = sphi 0, %s117
      %s137 = sphi 0, %s139
      %s140 = sphi 0, %s137
      %s141 = sphi 0, %s140
      %s157 = sphi 0, %s141
    $region4: #{tpu_custom_call.1} parent=1 // loop_header_branch
      %20 = sbr.rel (%p18) target = $region8
    $region5: #{tpu_custom_call.1} parent=1 // loop_body
      %s22 = ssub.s32 %s17, 1
      %s23 = ssub.s32 %s17, 2
      %s24 = sadd.s32 %s17, 1
      %s26 = sadd.s32 %s25, 1
      %p29 = scmp.eq.s32.totalorder %s17, 1
      %p30 = scmp.ne.s32.totalorder %s25, %s27
      %p31 = scmp.eq.s32.totalorder %s17, 0
      %p32 = por %p30, %p31
      %p33 = scmp.ne.s32.totalorder %s25, %s27
      %p34 = scmp.eq.s32.totalorder %s22, 1
      %p35 = por %p33, %p34
      %p36 = scmp.ne.s32.totalorder %s27, %s28
      %p37 = scmp.eq.s32.totalorder %s22, 0
      %p38 = por %p36, %p37
      %p39 = scmp.ne.s32.totalorder %s27, %s28
      %p40 = scmp.eq.s32.totalorder %s23, 1
      %p41 = por %p39, %p40
      %p43 = scmp.ne.s32.totalorder %s28, %s42
      %p44 = scmp.eq.s32.totalorder %s23, 0
      %p45 = por %p43, %p44
      %s46 = ssub.s32 %s17, %s24
      %p47 = scmp.eq.s32.totalorder %s46, 0
      %s49 = sadd.s32 %s48, 1
      %s50 = scalar_select %p47, %s48, %s49
      %p53 = pneg %p47
      %p54 = scmp.eq.s32.totalorder %s17, 1
      %p55 = por %p53, %p54
      %p56 = scmp.ne.s32.totalorder %s48, %s51
      %p57 = scmp.eq.s32.totalorder %s17, 0
      %p58 = por %p56, %p57
      %p59 = scmp.ne.s32.totalorder %s48, %s51
      %p60 = scmp.eq.s32.totalorder %s22, 1
      %p61 = por %p59, %p60
      %p62 = scmp.ne.s32.totalorder %s51, %s52
      %p63 = scmp.eq.s32.totalorder %s22, 0
      %p64 = por %p62, %p63
      %p65 = scmp.ne.s32.totalorder %s51, %s52
      %p66 = scmp.eq.s32.totalorder %s23, 1
      %p67 = por %p65, %p66
      %p69 = scmp.ne.s32.totalorder %s52, %s68
      %p70 = scmp.eq.s32.totalorder %s23, 0
      %p71 = por %p69, %p70
      %s73 = sadd.s32 %s72, 1
      %p76 = scmp.eq.s32.totalorder %s17, 1
      %p77 = scmp.ne.s32.totalorder %s72, %s74
      %p78 = scmp.eq.s32.totalorder %s17, 0
      %p79 = por %p77, %p78
      %p80 = scmp.ne.s32.totalorder %s72, %s74
      %p81 = scmp.eq.s32.totalorder %s22, 1
      %p82 = por %p80, %p81
      %p83 = scmp.ne.s32.totalorder %s74, %s75
      %p84 = scmp.eq.s32.totalorder %s22, 0
      %p85 = por %p83, %p84
      %p86 = scmp.ne.s32.totalorder %s74, %s75
      %p87 = scmp.eq.s32.totalorder %s23, 1
      %p88 = por %p86, %p87
      %p90 = scmp.ne.s32.totalorder %s75, %s89
      %p91 = scmp.eq.s32.totalorder %s23, 0
      %p92 = por %p90, %p91
      %s94 = sadd.s32 %s93, 1
      %p97 = scmp.eq.s32.totalorder %s17, 1
      %p98 = scmp.ne.s32.totalorder %s93, %s95
      %p99 = scmp.eq.s32.totalorder %s17, 0
      %p100 = por %p98, %p99
      %p101 = scmp.ne.s32.totalorder %s93, %s95
      %p102 = scmp.eq.s32.totalorder %s22, 1
      %p103 = por %p101, %p102
      %p104 = scmp.ne.s32.totalorder %s95, %s96
      %p105 = scmp.eq.s32.totalorder %s22, 0
      %p106 = por %p104, %p105
      %p107 = scmp.ne.s32.totalorder %s95, %s96
      %p108 = scmp.eq.s32.totalorder %s23, 1
      %p109 = por %p107, %p108
      %p111 = scmp.ne.s32.totalorder %s96, %s110
      %p112 = scmp.eq.s32.totalorder %s23, 0
      %p113 = por %p111, %p112
      %s115 = sadd.s32 %s114, 1
      %p118 = scmp.eq.s32.totalorder %s17, 1
      %p119 = scmp.ne.s32.totalorder %s114, %s116
      %p120 = scmp.eq.s32.totalorder %s17, 0
      %p121 = por %p119, %p120
      %p122 = scmp.ne.s32.totalorder %s114, %s116
      %p123 = scmp.eq.s32.totalorder %s22, 1
      %p124 = por %p122, %p123
      %p125 = scmp.ne.s32.totalorder %s116, %s117
      %p126 = scmp.eq.s32.totalorder %s22, 0
      %p127 = por %p125, %p126
      %p128 = scmp.ne.s32.totalorder %s116, %s117
      %p129 = scmp.eq.s32.totalorder %s23, 1
      %p130 = por %p128, %p129
      %p132 = scmp.ne.s32.totalorder %s117, %s131
      %p133 = scmp.eq.s32.totalorder %s23, 0
      %p134 = por %p132, %p133
      %s135 = ssub.s32 %s17, %s24
      %p136 = scmp.eq.s32.totalorder %s135, 0
      %s138 = sadd.s32 %s137, 1
      %s139 = scalar_select %p136, %s137, %s138
      %p142 = pneg %p136
      %p143 = scmp.eq.s32.totalorder %s17, 1
      %p144 = por %p142, %p143
      %p145 = scmp.ne.s32.totalorder %s137, %s140
      %p146 = scmp.eq.s32.totalorder %s17, 0
      %p147 = por %p145, %p146
      %p148 = scmp.ne.s32.totalorder %s137, %s140
      %p149 = scmp.eq.s32.totalorder %s22, 1
      %p150 = por %p148, %p149
      %p151 = scmp.ne.s32.totalorder %s140, %s141
      %p152 = scmp.eq.s32.totalorder %s22, 0
      %p153 = por %p151, %p152
      %p154 = scmp.ne.s32.totalorder %s140, %s141
      %p155 = scmp.eq.s32.totalorder %s23, 1
      %p156 = por %p154, %p155
      %p158 = scmp.ne.s32.totalorder %s141, %s157
      %p159 = scmp.eq.s32.totalorder %s23, 0
      %p160 = por %p158, %p159
      %p161 = scmp.le.s32.totalorder 1, %s17
      %p162 = scmp.lt.s32.totalorder %s17, 3
      %p163 = pnand %p161, %p162
      %p164 = pneg %p163
      // Predicated region
      $region9: #{tpu_custom_call.1} parent=5 // pred_check
        _
      $region10: #{tpu_custom_call.1} parent=5 // pred_check_branch
        %166 = sbr.rel (%p163) target = $region12
      $region11: #{tpu_custom_call.1} parent=5 // pred_region
        %s167 = ssub.s32 %s17, 1
        // Predicated region
        $region13: #{tpu_custom_call.1} parent=11 // pred_check
          %p168 = pneg %p38
        $region14: #{tpu_custom_call.1} parent=11 // pred_check_branch
          %170 = sbr.rel (%p168) target = $region16
        $region15: #{tpu_custom_call.1} parent=11 // pred_region
          _
        $region16: #{tpu_custom_call.1} parent=11 // pred_fallthru
          _
        // Predicated region
        $region17: #{tpu_custom_call.1} parent=11 // pred_check
          %p171 = pneg %p85
        $region18: #{tpu_custom_call.1} parent=11 // pred_check_branch
          %173 = sbr.rel (%p171) target = $region20
        $region19: #{tpu_custom_call.1} parent=11 // pred_region
          %s175 = ssub.s32 6144, 6144
          %176 = vsyncadd [#allocation4], %s175
          %s177 = sshll.u32 [#allocation3], 4
          %s178 = int_to_ptr.vmem [resolvable:$true] %s177
          %183 = dma.hbm_to_vmem [thread:$0]  %s2, 6144, %s178, [#allocation4], 128, 128, 8
        $region20: #{tpu_custom_call.1} parent=11 // pred_fallthru
          _
        // Predicated region
        $region21: #{tpu_custom_call.1} parent=11 // pred_check
          %p184 = pneg %p106
        $region22: #{tpu_custom_call.1} parent=11 // pred_check_branch
          %186 = sbr.rel (%p184) target = $region24
        $region23: #{tpu_custom_call.1} parent=11 // pred_region
          %s188 = ssub.s32 2048, 2048
          %189 = vsyncadd [#allocation7], %s188
          %s190 = sshll.u32 [#allocation6], 4
          %s191 = int_to_ptr.vmem [resolvable:$true] %s190
          %196 = dma.hbm_to_vmem [thread:$0]  %s3, 2048, %s191, [#allocation7], 128, 128, 8
        $region24: #{tpu_custom_call.1} parent=11 // pred_fallthru
          _
        // Predicated region
        $region25: #{tpu_custom_call.1} parent=11 // pred_check
          %p197 = pneg %p127
        $region26: #{tpu_custom_call.1} parent=11 // pred_check_branch
          %199 = sbr.rel (%p197) target = $region28
        $region27: #{tpu_custom_call.1} parent=11 // pred_region
          _
        $region28: #{tpu_custom_call.1} parent=11 // pred_fallthru
          _
      $region12: #{tpu_custom_call.1} parent=5 // pred_fallthru
        _
      %p200 = scmp.lt.s32.totalorder %s17, 2
      // Predicated region
      $region29: #{tpu_custom_call.1} parent=5 // pred_check
        %p201 = pneg %p200
      $region30: #{tpu_custom_call.1} parent=5 // pred_check_branch
        %203 = sbr.rel (%p201) target = $region32
      $region31: #{tpu_custom_call.1} parent=5 // pred_region
        // Predicated region
        $region33: #{tpu_custom_call.1} parent=31 // pred_check
          %p204 = pneg %p58
        $region34: #{tpu_custom_call.1} parent=31 // pred_check_branch
          %206 = sbr.rel (%p204) target = $region36
        $region35: #{tpu_custom_call.1} parent=31 // pred_region
          %s207 = smul.u32 4, %s17
          %p208 = scmp.lt.s32.totalorder %s207, 7
          %s209 = scalar_select %p208, %s207, 7
          %s210 = smul.addr %s209, 8
          %s211 = scalar_lea.vmem %s1, %s210
          %s212 = smul.u32 4, %s17
        $region36: #{tpu_custom_call.1} parent=31 // pred_fallthru
          _
      $region32: #{tpu_custom_call.1} parent=5 // pred_fallthru
        _
      %p213 = scmp.le.s32.totalorder 1, %s17
      %p214 = scmp.lt.s32.totalorder %s17, 3
      %p215 = pnand %p213, %p214
      %p216 = pneg %p215
      // Predicated region
      $region37: #{tpu_custom_call.1} parent=5 // pred_check
        _
      $region38: #{tpu_custom_call.1} parent=5 // pred_check_branch
        %218 = sbr.rel (%p215) target = $region40
      $region39: #{tpu_custom_call.1} parent=5 // pred_region
        %s219 = ssub.s32 %s17, 1
        // Predicated region
        $region41: #{tpu_custom_call.1} parent=39 // pred_check
          %p220 = pneg %p85
        $region42: #{tpu_custom_call.1} parent=39 // pred_check_branch
          %222 = sbr.rel (%p220) target = $region44
        $region43: #{tpu_custom_call.1} parent=39 // pred_region
          %223 = dma.done [#allocation4], 6144
        $region44: #{tpu_custom_call.1} parent=39 // pred_fallthru
          _
        // Predicated region
        $region45: #{tpu_custom_call.1} parent=39 // pred_check
          %p224 = pneg %p106
        $region46: #{tpu_custom_call.1} parent=39 // pred_check_branch
          %226 = sbr.rel (%p224) target = $region48
        $region47: #{tpu_custom_call.1} parent=39 // pred_region
          %227 = dma.done [#allocation7], 2048
        $region48: #{tpu_custom_call.1} parent=39 // pred_fallthru
          _
        %p228 = pneg %p38
        %p229 = pneg %p35
        %s230 = smul.u32 4, %s22
        %p231 = scmp.lt.s32.totalorder %s230, 7
        %s232 = scalar_select %p231, %s230, 7
        %s233 = smul.addr %s232, 8
        %s234 = scalar_lea.vmem %s1, %s233
        %p235 = pneg %p64
        %p236 = pneg %p61
        %p237 = pneg %p85
        %p238 = pneg %p82
        %p239 = pneg %p106
        %p240 = pneg %p103
        %p241 = pneg %p127
        %p242 = pneg %p124
        %p243 = pneg %p153
        %p244 = pneg %p150
        %s245 = sand.u32 %s140, 1
        %s246 = scalar_lea.sflag [#allocation5], %s245
        %s247 = sand.u32 %s140, 1
        %s248 = smul.addr %s247, 32
        %s249 = scalar_lea.vmem [#allocation8], %s248
        %s250 = smul.u32 4, %s22
        %p251 = scmp.lt.s32.totalorder %s250, 7
        %s252 = scalar_select %p251, %s250, 7
        %s253 = smul.addr %s252, 8
        %s254 = scalar_lea.vmem %s1, %s253
        %s255 = smul.u32 4, %s22
        %s256 = smul.u32 4, %s22
        %v257 = vld [vmem:[%s254] sm:$0xff]
        %v258 = vld [vmem:[%s254 + $0x8] sm:$0xff]
        %v259 = vld [vmem:[%s254 + $0x10] sm:$0xff]
        %v260 = vld [vmem:[%s254 + $0x18] sm:$0xff]
        %v261 = vld [vmem:[#allocation3] sm:$0xff]
        %v262 = vld [vmem:[#allocation3 + $0x8] sm:$0xff]
        %v263 = vld [vmem:[#allocation3 + $0x10] sm:$0xff]
        %v264 = vld [vmem:[#allocation3 + $0x18] sm:$0xff]
        %v265 = vld [vmem:[%s4] sm:$0x1]
        %v266 = vlaneseq
        %v267 = vshrl.u32 %v266, 7
        %v268 = vsub.s32 0, %v267
        %v269 = vrot.slane %v265, %v268
        %vm270 = vcmask 261120
        %v272 = vsel %vm270, %v257, 0
        %v275 = vsel %vm270, %v258, 0
        %v278 = vsel %vm270, %v259, 0
        %v281 = vsel %vm270, %v260, 0
        %283 = vmatprep.subr.mxu0 0.0
        %284 = vmatpush1.msra.mxu0 %v261
        %285 = vmatprep.subr.mxu0 0.0
        %286 = vmatpush1.msra.mxu0 %v262
        %287 = vmatprep.subr.mxu0 0.0
        %288 = vmatpush1.msra.mxu0 %v263
        %289 = vmatprep.subr.mxu0 0.0
        %290 = vmatpush1.msra.mxu0 %v264
        %291 = vmatprep.subr.mxu0 0.0
        %292 = vmatpush1.msra.mxu0 0.0
        %293 = vmatprep.subr.mxu0 0.0
        %294 = vmatpush1.msra.mxu0 0.0
        %295 = vmatprep.subr.mxu0 0.0
        %296 = vmatpush1.msra.mxu0 0.0
        %297 = vmatprep.subr.mxu0 0.0
        %298 = vmatpush1.msra.mxu0 0.0
        %299 = vmatprep.subr.mxu0 0.0
        %300 = vmatpush1.msra.mxu0 0.0
        %301 = vmatprep.subr.mxu0 0.0
        %302 = vmatpush1.msra.mxu0 0.0
        %303 = vmatprep.subr.mxu0 0.0
        %304 = vmatpush1.msra.mxu0 0.0
        %305 = vmatprep.subr.mxu0 0.0
        %306 = vmatpush1.msra.mxu0 0.0
        %307 = vmatprep.subr.mxu0 0.0
        %308 = vmatpush1.msra.mxu0 0.0
        %309 = vmatprep.subr.mxu0 0.0
        %310 = vmatpush1.msra.mxu0 0.0
        %311 = vmatprep.subr.mxu0 0.0
        %312 = vmatpush1.msra.mxu0 0.0
        %313 = vmatprep.subr.mxu0 0.0
        %314 = vmatpush1.msra.mxu0 0.0
        %315 = vmatprep.subr.mxu0 0.0
        %316 = vmatpush1.msra.mxu0 0.0
        %317 = vmatprep.subr.mxu0 0.0
        %318 = vmatpush1.msra.mxu0 0.0
        %319 = vmatprep.subr.mxu0 0.0
        %320 = vmatpush1.msra.mxu0 0.0
        %321 = vmatprep.subr.mxu0 0.0
        %322 = vmatpush1.msra.mxu0 0.0
        %323 = vmatprep.subr.mxu0 0.0
        %324 = vmatpush1.msra.mxu0 0.0
        %325 = vmatprep.subr.mxu0 0.0
        %326 = vmatpush1.msra.mxu0 0.0
        %327 = vmatprep.subr.mxu0 0.0
        %328 = vmatpush1.msra.mxu0 0.0
        %329 = vmatprep.subr.mxu0 0.0
        %330 = vmatpush1.msra.mxu0 0.0
        %331 = vmatprep.subr.mxu0 0.0
        %332 = vmatpush1.msra.mxu0 0.0
        %333 = vmatprep.subr.mxu0 0.0
        %334 = vmatpush1.msra.mxu0 0.0
        %335 = vmatprep.subr.mxu0 0.0
        %336 = vmatpush1.msra.mxu0 0.0
        %337 = vmatprep.subr.mxu0 0.0
        %338 = vmatpush1.msra.mxu0 0.0
        %339 = vmatprep.subr.mxu0 0.0
        %340 = vmatpush1.msra.mxu0 0.0
        %341 = vmatprep.subr.mxu0 0.0
        %342 = vmatpush1.msra.mxu0 0.0
        %343 = vmatprep.subr.mxu0 0.0
        %344 = vmatpush1.msra.mxu0 0.0
        %345 = vmatprep.subr.mxu0 0.0
        %346 = vmatpush1.msra.mxu0 0.0
        %347 = vmatprep.mubr.f32.mxu0 0.0
        %348 = vmatmul.mubr.f32.gmra.mrb[0].mxu0 %v272
        %v349 = vpop.f32.mrb[0].mxu0
        %v350 = vadd.f32 %v269, %v349
        %v351 = vpop.f32.mrb[0].mxu0
        %352 = vmatprep.mubr.f32.mxu0 0.0
        %353 = vmatmul.mubr.f32.gmra.mrb[0].mxu0 %v275
        %v354 = vpop.f32.mrb[0].mxu0
        %v355 = vadd.f32 %v269, %v354
        %v356 = vpop.f32.mrb[0].mxu0
        %357 = vmatprep.mubr.f32.mxu0 0.0
        %358 = vmatmul.mubr.f32.gmra.mrb[0].mxu0 %v278
        %v359 = vpop.f32.mrb[0].mxu0
        %v360 = vadd.f32 %v269, %v359
        %v361 = vpop.f32.mrb[0].mxu0
        %362 = vmatprep.mubr.f32.mxu0 0.0
        %363 = vmatmul.mubr.f32.gmra.mrb[0].mxu0 %v281
        %v364 = vpop.f32.mrb[0].mxu0
        %v365 = vadd.f32 %v269, %v364
        %v366 = vpop.f32.mrb[0].mxu0
        %367 = vdwg.mxu0
        %v368 = vmax.f32 %v350, 0.0
        %v369 = vmax.f32 %v355, 0.0
        %v370 = vmax.f32 %v360, 0.0
        %v371 = vmax.f32 %v365, 0.0
        %v372 = vld [vmem:[#allocation3 + $0x80] sm:$0xff]
        %v373 = vld [vmem:[#allocation3 + $0x88] sm:$0xff]
        %v374 = vld [vmem:[#allocation3 + $0x90] sm:$0xff]
        %v375 = vld [vmem:[#allocation3 + $0x98] sm:$0xff]
        %v376 = vld [vmem:[#allocation3 + $0xa0] sm:$0xff]
        %v377 = vld [vmem:[#allocation3 + $0xa8] sm:$0xff]
        %v378 = vld [vmem:[#allocation3 + $0xb0] sm:$0xff]
        %v379 = vld [vmem:[#allocation3 + $0xb8] sm:$0xff]
        %v380 = vld [vmem:[#allocation3 + $0xc0] sm:$0xff]
        %v381 = vld [vmem:[#allocation3 + $0xc8] sm:$0xff]
        %v382 = vld [vmem:[#allocation3 + $0xd0] sm:$0xff]
        %v383 = vld [vmem:[#allocation3 + $0xd8] sm:$0xff]
        %v384 = vld [vmem:[#allocation3 + $0xe0] sm:$0xff]
        %v385 = vld [vmem:[#allocation3 + $0xe8] sm:$0xff]
        %v386 = vld [vmem:[#allocation3 + $0xf0] sm:$0xff]
        %v387 = vld [vmem:[#allocation3 + $0xf8] sm:$0xff]
        %v388 = vld [vmem:[%s4 + $0x1] sm:$0x1]
        %v389 = vlaneseq
        %v390 = vshrl.u32 %v389, 7
        %v391 = vsub.s32 0, %v390
        %v392 = vrot.slane %v388, %v391
        %393 = vmatprep.subr.mxu0 0.0
        %394 = vmatpush1.msra.mxu0 %v372
        %395 = vmatprep.subr.mxu0 0.0
        %396 = vmatpush1.msra.mxu0 %v373
        %397 = vmatprep.subr.mxu0 0.0
        %398 = vmatpush1.msra.mxu0 %v374
        %399 = vmatprep.subr.mxu0 0.0
        %400 = vmatpush1.msra.mxu0 %v375
        %401 = vmatprep.subr.mxu0 0.0
        %402 = vmatpush1.msra.mxu0 %v376
        %403 = vmatprep.subr.mxu0 0.0
        %404 = vmatpush1.msra.mxu0 %v377
        %405 = vmatprep.subr.mxu0 0.0
        %406 = vmatpush1.msra.mxu0 %v378
        %407 = vmatprep.subr.mxu0 0.0
        %408 = vmatpush1.msra.mxu0 %v379
        %409 = vmatprep.subr.mxu0 0.0
        %410 = vmatpush1.msra.mxu0 %v380
        %411 = vmatprep.subr.mxu0 0.0
        %412 = vmatpush1.msra.mxu0 %v381
        %413 = vmatprep.subr.mxu0 0.0
        %414 = vmatpush1.msra.mxu0 %v382
        %415 = vmatprep.subr.mxu0 0.0
        %416 = vmatpush1.msra.mxu0 %v383
        %417 = vmatprep.subr.mxu0 0.0
        %418 = vmatpush1.msra.mxu0 %v384
        %419 = vmatprep.subr.mxu0 0.0
        %420 = vmatpush1.msra.mxu0 %v385
        %421 = vmatprep.subr.mxu0 0.0
        %422 = vmatpush1.msra.mxu0 %v386
        %423 = vmatprep.subr.mxu0 0.0
        %424 = vmatpush1.msra.mxu0 %v387
        %425 = vmatprep.subr.mxu0 0.0
        %426 = vmatpush1.msra.mxu0 0.0
        %427 = vmatprep.subr.mxu0 0.0
        %428 = vmatpush1.msra.mxu0 0.0
        %429 = vmatprep.subr.mxu0 0.0
        %430 = vmatpush1.msra.mxu0 0.0
        %431 = vmatprep.subr.mxu0 0.0
        %432 = vmatpush1.msra.mxu0 0.0
        %433 = vmatprep.subr.mxu0 0.0
        %434 = vmatpush1.msra.mxu0 0.0
        %435 = vmatprep.subr.mxu0 0.0
        %436 = vmatpush1.msra.mxu0 0.0
        %437 = vmatprep.subr.mxu0 0.0
        %438 = vmatpush1.msra.mxu0 0.0
        %439 = vmatprep.subr.mxu0 0.0
        %440 = vmatpush1.msra.mxu0 0.0
        %441 = vmatprep.subr.mxu0 0.0
        %442 = vmatpush1.msra.mxu0 0.0
        %443 = vmatprep.subr.mxu0 0.0
        %444 = vmatpush1.msra.mxu0 0.0
        %445 = vmatprep.subr.mxu0 0.0
        %446 = vmatpush1.msra.mxu0 0.0
        %447 = vmatprep.subr.mxu0 0.0
        %448 = vmatpush1.msra.mxu0 0.0
        %449 = vmatprep.subr.mxu0 0.0
        %450 = vmatpush1.msra.mxu0 0.0
        %451 = vmatprep.subr.mxu0 0.0
        %452 = vmatpush1.msra.mxu0 0.0
        %453 = vmatprep.subr.mxu0 0.0
        %454 = vmatpush1.msra.mxu0 0.0
        %455 = vmatprep.subr.mxu0 0.0
        %456 = vmatpush1.msra.mxu0 0.0
        %457 = vmatprep.mubr.f32.mxu0 0.0
        %458 = vmatmul.mubr.f32.gmra.mrb[0].mxu0 %v368
        %v459 = vpop.f32.mrb[0].mxu0
        %v460 = vadd.f32 %v392, %v459
        %v461 = vpop.f32.mrb[0].mxu0
        %462 = vmatprep.mubr.f32.mxu0 0.0
        %463 = vmatmul.mubr.f32.gmra.mrb[0].mxu0 %v369
        %v464 = vpop.f32.mrb[0].mxu0
        %v465 = vadd.f32 %v392, %v464
        %v466 = vpop.f32.mrb[0].mxu0
        %467 = vmatprep.mubr.f32.mxu0 0.0
        %468 = vmatmul.mubr.f32.gmra.mrb[0].mxu0 %v370
        %v469 = vpop.f32.mrb[0].mxu0
        %v470 = vadd.f32 %v392, %v469
        %v471 = vpop.f32.mrb[0].mxu0
        %472 = vmatprep.mubr.f32.mxu0 0.0
        %473 = vmatmul.mubr.f32.gmra.mrb[0].mxu0 %v371
        %v474 = vpop.f32.mrb[0].mxu0
        %v475 = vadd.f32 %v392, %v474
        %v476 = vpop.f32.mrb[0].mxu0
        %477 = vdwg.mxu0
        %v478 = vmax.f32 %v460, 0.0
        %v479 = vmax.f32 %v465, 0.0
        %v480 = vmax.f32 %v470, 0.0
        %v481 = vmax.f32 %v475, 0.0
        %v482 = vld [vmem:[#allocation3 + $0x100] sm:$0xff]
        %v483 = vld [vmem:[#allocation3 + $0x108] sm:$0xff]
        %v484 = vld [vmem:[#allocation3 + $0x110] sm:$0xff]
        %v485 = vld [vmem:[#allocation3 + $0x118] sm:$0xff]
        %v486 = vld [vmem:[#allocation3 + $0x120] sm:$0xff]
        %v487 = vld [vmem:[#allocation3 + $0x128] sm:$0xff]
        %v488 = vld [vmem:[#allocation3 + $0x130] sm:$0xff]
        %v489 = vld [vmem:[#allocation3 + $0x138] sm:$0xff]
        %v490 = vld [vmem:[#allocation3 + $0x140] sm:$0xff]
        %v491 = vld [vmem:[#allocation3 + $0x148] sm:$0xff]
        %v492 = vld [vmem:[#allocation3 + $0x150] sm:$0xff]
        %v493 = vld [vmem:[#allocation3 + $0x158] sm:$0xff]
        %v494 = vld [vmem:[#allocation3 + $0x160] sm:$0xff]
        %v495 = vld [vmem:[#allocation3 + $0x168] sm:$0xff]
        %v496 = vld [vmem:[#allocation3 + $0x170] sm:$0xff]
        %v497 = vld [vmem:[#allocation3 + $0x178] sm:$0xff]
        %v498 = vld [vmem:[%s4 + $0x2] sm:$0x1]
        %v499 = vlaneseq
        %v500 = vshrl.u32 %v499, 7
        %v501 = vsub.s32 0, %v500
        %v502 = vrot.slane %v498, %v501
        %503 = vmatprep.subr.mxu0 0.0
        %504 = vmatpush1.msra.mxu0 %v482
        %505 = vmatprep.subr.mxu0 0.0
        %506 = vmatpush1.msra.mxu0 %v483
        %507 = vmatprep.subr.mxu0 0.0
        %508 = vmatpush1.msra.mxu0 %v484
        %509 = vmatprep.subr.mxu0 0.0
        %510 = vmatpush1.msra.mxu0 %v485
        %511 = vmatprep.subr.mxu0 0.0
        %512 = vmatpush1.msra.mxu0 %v486
        %513 = vmatprep.subr.mxu0 0.0
        %514 = vmatpush1.msra.mxu0 %v487
        %515 = vmatprep.subr.mxu0 0.0
        %516 = vmatpush1.msra.mxu0 %v488
        %517 = vmatprep.subr.mxu0 0.0
        %518 = vmatpush1.msra.mxu0 %v489
        %519 = vmatprep.subr.mxu0 0.0
        %520 = vmatpush1.msra.mxu0 %v490
        %521 = vmatprep.subr.mxu0 0.0
        %522 = vmatpush1.msra.mxu0 %v491
        %523 = vmatprep.subr.mxu0 0.0
        %524 = vmatpush1.msra.mxu0 %v492
        %525 = vmatprep.subr.mxu0 0.0
        %526 = vmatpush1.msra.mxu0 %v493
        %527 = vmatprep.subr.mxu0 0.0
        %528 = vmatpush1.msra.mxu0 %v494
        %529 = vmatprep.subr.mxu0 0.0
        %530 = vmatpush1.msra.mxu0 %v495
        %531 = vmatprep.subr.mxu0 0.0
        %532 = vmatpush1.msra.mxu0 %v496
        %533 = vmatprep.subr.mxu0 0.0
        %534 = vmatpush1.msra.mxu0 %v497
        %535 = vmatprep.subr.mxu0 0.0
        %536 = vmatpush1.msra.mxu0 0.0
        %537 = vmatprep.subr.mxu0 0.0
        %538 = vmatpush1.msra.mxu0 0.0
        %539 = vmatprep.subr.mxu0 0.0
        %540 = vmatpush1.msra.mxu0 0.0
        %541 = vmatprep.subr.mxu0 0.0
        %542 = vmatpush1.msra.mxu0 0.0
        %543 = vmatprep.subr.mxu0 0.0
        %544 = vmatpush1.msra.mxu0 0.0
        %545 = vmatprep.subr.mxu0 0.0
        %546 = vmatpush1.msra.mxu0 0.0
        %547 = vmatprep.subr.mxu0 0.0
        %548 = vmatpush1.msra.mxu0 0.0
        %549 = vmatprep.subr.mxu0 0.0
        %550 = vmatpush1.msra.mxu0 0.0
        %551 = vmatprep.subr.mxu0 0.0
        %552 = vmatpush1.msra.mxu0 0.0
        %553 = vmatprep.subr.mxu0 0.0
        %554 = vmatpush1.msra.mxu0 0.0
        %555 = vmatprep.subr.mxu0 0.0
        %556 = vmatpush1.msra.mxu0 0.0
        %557 = vmatprep.subr.mxu0 0.0
        %558 = vmatpush1.msra.mxu0 0.0
        %559 = vmatprep.subr.mxu0 0.0
        %560 = vmatpush1.msra.mxu0 0.0
        %561 = vmatprep.subr.mxu0 0.0
        %562 = vmatpush1.msra.mxu0 0.0
        %563 = vmatprep.subr.mxu0 0.0
        %564 = vmatpush1.msra.mxu0 0.0
        %565 = vmatprep.subr.mxu0 0.0
        %566 = vmatpush1.msra.mxu0 0.0
        %567 = vmatprep.mubr.f32.mxu0 0.0
        %568 = vmatmul.mubr.f32.gmra.mrb[0].mxu0 %v478
        %v569 = vpop.f32.mrb[0].mxu0
        %v570 = vadd.f32 %v502, %v569
        %v571 = vpop.f32.mrb[0].mxu0
        %572 = vmatprep.mubr.f32.mxu0 0.0
        %573 = vmatmul.mubr.f32.gmra.mrb[0].mxu0 %v479
        %v574 = vpop.f32.mrb[0].mxu0
        %v575 = vadd.f32 %v502, %v574
        %v576 = vpop.f32.mrb[0].mxu0
        %577 = vmatprep.mubr.f32.mxu0 0.0
        %578 = vmatmul.mubr.f32.gmra.mrb[0].mxu0 %v480
        %v579 = vpop.f32.mrb[0].mxu0
        %v580 = vadd.f32 %v502, %v579
        %v581 = vpop.f32.mrb[0].mxu0
        %582 = vmatprep.mubr.f32.mxu0 0.0
        %583 = vmatmul.mubr.f32.gmra.mrb[0].mxu0 %v481
        %v584 = vpop.f32.mrb[0].mxu0
        %v585 = vadd.f32 %v502, %v584
        %v586 = vpop.f32.mrb[0].mxu0
        %587 = vdwg.mxu0
        %v588 = vmax.f32 %v570, 0.0
        %v589 = vmax.f32 %v575, 0.0
        %v590 = vmax.f32 %v580, 0.0
        %v591 = vmax.f32 %v585, 0.0
        %v592 = vld [vmem:[#allocation6] sm:$0xff]
        %v593 = vld [vmem:[#allocation6 + $0x8] sm:$0xff]
        %v594 = vld [vmem:[#allocation6 + $0x10] sm:$0xff]
        %v595 = vld [vmem:[#allocation6 + $0x18] sm:$0xff]
        %v596 = vld [vmem:[#allocation6 + $0x20] sm:$0xff]
        %v597 = vld [vmem:[#allocation6 + $0x28] sm:$0xff]
        %v598 = vld [vmem:[#allocation6 + $0x30] sm:$0xff]
        %v599 = vld [vmem:[#allocation6 + $0x38] sm:$0xff]
        %v600 = vld [vmem:[#allocation6 + $0x40] sm:$0xff]
        %v601 = vld [vmem:[#allocation6 + $0x48] sm:$0xff]
        %v602 = vld [vmem:[#allocation6 + $0x50] sm:$0xff]
        %v603 = vld [vmem:[#allocation6 + $0x58] sm:$0xff]
        %v604 = vld [vmem:[#allocation6 + $0x60] sm:$0xff]
        %v605 = vld [vmem:[#allocation6 + $0x68] sm:$0xff]
        %v606 = vld [vmem:[#allocation6 + $0x70] sm:$0xff]
        %v607 = vld [vmem:[#allocation6 + $0x78] sm:$0xff]
        %v608 = vld [vmem:[%s4 + $0x3] sm:$0x1]
        %v609 = vlaneseq
        %v610 = vshrl.u32 %v609, 7
        %v611 = vsub.s32 0, %v610
        %v612 = vrot.slane %v608, %v611
        %613 = vmatprep.subr.mxu0 0.0
        %614 = vmatpush1.msra.mxu0 %v592
        %615 = vmatprep.subr.mxu0 0.0
        %616 = vmatpush1.msra.mxu0 %v593
        %617 = vmatprep.subr.mxu0 0.0
        %618 = vmatpush1.msra.mxu0 %v594
        %619 = vmatprep.subr.mxu0 0.0
        %620 = vmatpush1.msra.mxu0 %v595
        %621 = vmatprep.subr.mxu0 0.0
        %622 = vmatpush1.msra.mxu0 %v596
        %623 = vmatprep.subr.mxu0 0.0
        %624 = vmatpush1.msra.mxu0 %v597
        %625 = vmatprep.subr.mxu0 0.0
        %626 = vmatpush1.msra.mxu0 %v598
        %627 = vmatprep.subr.mxu0 0.0
        %628 = vmatpush1.msra.mxu0 %v599
        %629 = vmatprep.subr.mxu0 0.0
        %630 = vmatpush1.msra.mxu0 %v600
        %631 = vmatprep.subr.mxu0 0.0
        %632 = vmatpush1.msra.mxu0 %v601
        %633 = vmatprep.subr.mxu0 0.0
        %634 = vmatpush1.msra.mxu0 %v602
        %635 = vmatprep.subr.mxu0 0.0
        %636 = vmatpush1.msra.mxu0 %v603
        %637 = vmatprep.subr.mxu0 0.0
        %638 = vmatpush1.msra.mxu0 %v604
        %639 = vmatprep.subr.mxu0 0.0
        %640 = vmatpush1.msra.mxu0 %v605
        %641 = vmatprep.subr.mxu0 0.0
        %642 = vmatpush1.msra.mxu0 %v606
        %643 = vmatprep.subr.mxu0 0.0
        %644 = vmatpush1.msra.mxu0 %v607
        %645 = vmatprep.subr.mxu0 0.0
        %646 = vmatpush1.msra.mxu0 0.0
        %647 = vmatprep.subr.mxu0 0.0
        %648 = vmatpush1.msra.mxu0 0.0
        %649 = vmatprep.subr.mxu0 0.0
        %650 = vmatpush1.msra.mxu0 0.0
        %651 = vmatprep.subr.mxu0 0.0
        %652 = vmatpush1.msra.mxu0 0.0
        %653 = vmatprep.subr.mxu0 0.0
        %654 = vmatpush1.msra.mxu0 0.0
        %655 = vmatprep.subr.mxu0 0.0
        %656 = vmatpush1.msra.mxu0 0.0
        %657 = vmatprep.subr.mxu0 0.0
        %658 = vmatpush1.msra.mxu0 0.0
        %659 = vmatprep.subr.mxu0 0.0
        %660 = vmatpush1.msra.mxu0 0.0
        %661 = vmatprep.subr.mxu0 0.0
        %662 = vmatpush1.msra.mxu0 0.0
        %663 = vmatprep.subr.mxu0 0.0
        %664 = vmatpush1.msra.mxu0 0.0
        %665 = vmatprep.subr.mxu0 0.0
        %666 = vmatpush1.msra.mxu0 0.0
        %667 = vmatprep.subr.mxu0 0.0
        %668 = vmatpush1.msra.mxu0 0.0
        %669 = vmatprep.subr.mxu0 0.0
        %670 = vmatpush1.msra.mxu0 0.0
        %671 = vmatprep.subr.mxu0 0.0
        %672 = vmatpush1.msra.mxu0 0.0
        %673 = vmatprep.subr.mxu0 0.0
        %674 = vmatpush1.msra.mxu0 0.0
        %675 = vmatprep.subr.mxu0 0.0
        %676 = vmatpush1.msra.mxu0 0.0
        %677 = vmatprep.mubr.f32.mxu0 0.0
        %678 = vmatmul.mubr.f32.gmra.mrb[0].mxu0 %v588
        %v679 = vpop.f32.mrb[0].mxu0
        %v680 = vadd.f32 %v612, %v679
        %v681 = vpop.f32.mrb[0].mxu0
        %682 = vmatprep.mubr.f32.mxu0 0.0
        %683 = vmatmul.mubr.f32.gmra.mrb[0].mxu0 %v589
        %v684 = vpop.f32.mrb[0].mxu0
        %v685 = vadd.f32 %v612, %v684
        %v686 = vpop.f32.mrb[0].mxu0
        %687 = vmatprep.mubr.f32.mxu0 0.0
        %688 = vmatmul.mubr.f32.gmra.mrb[0].mxu0 %v590
        %v689 = vpop.f32.mrb[0].mxu0
        %v690 = vadd.f32 %v612, %v689
        %v691 = vpop.f32.mrb[0].mxu0
        %692 = vmatprep.mubr.f32.mxu0 0.0
        %693 = vmatmul.mubr.f32.gmra.mrb[0].mxu0 %v591
        %v694 = vpop.f32.mrb[0].mxu0
        %v695 = vadd.f32 %v612, %v694
        %v696 = vpop.f32.mrb[0].mxu0
        %697 = vdwg.mxu0
        %698 = vmax.xlane.f32.xlu0 %v680
        %v699 = vpop.xlane.xlu0 %698
        %700 = vmax.xlane.f32.xlu0 %v685
        %v701 = vpop.xlane.xlu0 %700
        %702 = vmax.xlane.f32.xlu0 %v690
        %v703 = vpop.xlane.xlu0 %702
        %704 = vmax.xlane.f32.xlu0 %v695
        %v705 = vpop.xlane.xlu0 %704
        %v706 = vsub.f32 %v680, %v699
        %v707 = vsub.f32 %v685, %v701
        %v708 = vsub.f32 %v690, %v703
        %v709 = vsub.f32 %v695, %v705
        %v710 = vmul.f32 %v706, 1.442695
        %v711 = vpow.pop %v710
        %v712 = vmul.f32 %v707, 1.442695
        %v713 = vpow.pop %v712
        %v714 = vmul.f32 %v708, 1.442695
        %v715 = vpow.pop %v714
        %v716 = vmul.f32 %v709, 1.442695
        %v717 = vpow.pop %v716
        %718 = vadd.xlane.f32.xlu0 %v711
        %v719 = vpop.xlane.xlu0 %718
        %720 = vadd.xlane.f32.xlu0 %v713
        %v721 = vpop.xlane.xlu0 %720
        %722 = vadd.xlane.f32.xlu0 %v715
        %v723 = vpop.xlane.xlu0 %722
        %724 = vadd.xlane.f32.xlu0 %v717
        %v725 = vpop.xlane.xlu0 %724
        %v726 = vrcp.pop %v719
        %v727 = vrcp.pop %v721
        %v728 = vrcp.pop %v723
        %v729 = vrcp.pop %v725
        %s730 = sld [smem:[#allocation2]]
        %v731 = vstv %s730
        %v732 = vmul.f32 %v726, %v731
        %v733 = vmul.f32 %v727, %v731
        %v734 = vmul.f32 %v728, %v731
        %v735 = vmul.f32 %v729, %v731
        %v736 = vmul.f32 %v711, %v732
        %v737 = vmul.f32 %v713, %v733
        %v738 = vmul.f32 %v715, %v734
        %v739 = vmul.f32 %v717, %v735
        %740 = vst [vmem:[%s249] sm:$0xff] %v736
        %741 = vst [vmem:[%s249 + $0x8] sm:$0xff] %v737
        %742 = vst [vmem:[%s249 + $0x10] sm:$0xff] %v738
        %743 = vst [vmem:[%s249 + $0x18] sm:$0xff] %v739
        %s744 = sand.u32 %s140, 1
        %s745 = scalar_lea.sflag [#allocation5], %s744
        %s746 = sand.u32 %s140, 1
        %s747 = smul.addr %s746, 32
        %s748 = scalar_lea.vmem [#allocation8], %s747
        // Predicated region
        $region49: #{tpu_custom_call.1} parent=39 // pred_check
          %p749 = pneg %p150
        $region50: #{tpu_custom_call.1} parent=39 // pred_check_branch
          %751 = sbr.rel (%p749) target = $region52
        $region51: #{tpu_custom_call.1} parent=39 // pred_region
          %s752 = smul.u32 4, %s22
          %s754 = ssub.s32 512, 512
          %755 = vsyncadd %s745, %s754
          %s756 = smul.addr %s752, 128
          %s757 = scalar_lea.hbm %s5, %s756
          %s758 = sshll.u32 %s748, 4
          %s759 = int_to_ptr.vmem [resolvable:$true] %s758
          %764 = dma.vmem_to_hbm [thread:$0]  %s759, 512, %s757, %s745, 128, 128, 8
        $region52: #{tpu_custom_call.1} parent=39 // pred_fallthru
          _
      $region40: #{tpu_custom_call.1} parent=5 // pred_fallthru
        _
      %p765 = scmp.le.s32.totalorder 2, %s17
      // Predicated region
      $region53: #{tpu_custom_call.1} parent=5 // pred_check
        %p766 = pneg %p765
      $region54: #{tpu_custom_call.1} parent=5 // pred_check_branch
        %768 = sbr.rel (%p766) target = $region56
      $region55: #{tpu_custom_call.1} parent=5 // pred_region
        %s769 = ssub.s32 %s17, 2
        // Predicated region
        $region57: #{tpu_custom_call.1} parent=55 // pred_check
          %p770 = pneg %p156
        $region58: #{tpu_custom_call.1} parent=55 // pred_check_branch
          %772 = sbr.rel (%p770) target = $region60
        $region59: #{tpu_custom_call.1} parent=55 // pred_region
          %s773 = sand.u32 %s141, 1
          %s774 = scalar_lea.sflag [#allocation5], %s773
          %s775 = sand.u32 %s141, 1
          %s776 = smul.addr %s775, 32
          %s777 = scalar_lea.vmem [#allocation8], %s776
          %778 = dma.done %s774, 512
        $region60: #{tpu_custom_call.1} parent=55 // pred_fallthru
          _
      $region56: #{tpu_custom_call.1} parent=5 // pred_fallthru
        _
    $region6: #{tpu_custom_call.1} parent=1 // loop_footer
      %s21 = sadd.s32 1, %s17
    $region7: #{tpu_custom_call.1} parent=1 // loop_footer_branch
      %16 = sbr.rel target = $region3
    $region8: #{tpu_custom_call.1} parent=1 // loop_exit
      _
    %779 = vsyncpa [#allocation4], 1
    %s780 = scalar_lea.sflag [#allocation4], 1
    %781 = vsyncpa %s780, 1
    %782 = vsyncpa [#allocation7], 1
    %783 = vsyncpa [#allocation5], 1
    %s784 = scalar_lea.sflag [#allocation5], 1
    %785 = vsyncpa %s784, 1

</llo_original>
